<compile_context>
chip_gen: v7x
topology: tpu7x:2x2x1
jax: 0.10.0
libtpu: 0.0.40
codegen_flags: <defaults>
</compile_context>

<pallas_src>
import functools

import numpy as np
import jax
import jax.numpy as jnp
from jax import lax
from jax.experimental import pallas as pl
from jax.experimental.pallas import tpu as pltpu

_EPS = 1e-5  # torch GroupNorm default


def pick_n_groups(n_channels):
    assert n_channels % 2 == 0, "n_channels must be even"
    if n_channels % 16 == 0:
        return n_channels // 16
    elif n_channels % 8 == 0:
        return n_channels // 8
    elif n_channels % 4 == 0:
        return n_channels // 4
    else:
        return n_channels // 2


def _round_up(x, m):
    return (x + m - 1) // m * m


def _vmem_capacity_bytes():
    try:
        return int(pltpu.get_tpu_info().vmem_capacity_bytes)
    except Exception:
        return 64 * 1024 * 1024  # v7x per-TensorCore VMEM (most restrictive)


# ----------------------------------------------------------------------------
# Shared GroupNorm + Swish epilogue (f32)
# ----------------------------------------------------------------------------
def _gn_swish(f, s1, s2, gamma, beta, *, G, Cg, inv_n, swish_beta):
    """f: (C4, L) f32 conv output tile; s1/s2: (C4, 1) per-channel sum / sumsq
    over the (unpadded) spatial extent; gamma/beta: (C4, 1) affine params."""
    C4 = G * Cg
    # Segmented group reduce: split the channel (sublane) axis into (G, Cg)
    # (Cg is always a multiple of 8 here) -- no MXU matvec, no proj operand.
    gs1 = jnp.sum(s1.reshape(G, Cg, 1), axis=1, keepdims=True)     # (G,1,1)
    gs2 = jnp.sum(s2.reshape(G, Cg, 1), axis=1, keepdims=True)     # (G,1,1)
    gmean = gs1 * inv_n
    gvar = jnp.maximum(gs2 * inv_n - gmean * gmean, 0.0)           # biased var
    grstd = lax.rsqrt(gvar + _EPS)
    mean_c = jnp.broadcast_to(gmean, (G, Cg, 1)).reshape(C4, 1)
    rstd_c = jnp.broadcast_to(grstd, (G, Cg, 1)).reshape(C4, 1)
    y = (f - mean_c) * (rstd_c * gamma) + beta                     # one fused pass
    return y * jax.nn.sigmoid(swish_beta * y)


# ----------------------------------------------------------------------------
# Path A: fused single-block-per-sample kernel (whole HW slab fits in VMEM)
# ----------------------------------------------------------------------------
def _fused_kernel(p_ref, w_ref, g_ref, b_ref, o_ref, *, G, Cg, inv_n, swish_beta):
    # p_ref: (1, Cin*4, HWp) bf16   w_ref: (C4, Cin*4) bf16   o_ref: (1, C4, HWp)
    f = jnp.dot(w_ref[...], p_ref[0],
                preferred_element_type=jnp.float32)                # (C4, HWp) f32
    s1 = jnp.sum(f, axis=1, keepdims=True)                         # (C4, 1)
    s2 = jnp.sum(f * f, axis=1, keepdims=True)                     # (C4, 1)
    out = _gn_swish(f, s1, s2, g_ref[...], b_ref[...],
                    G=G, Cg=Cg, inv_n=inv_n, swish_beta=swish_beta)
    o_ref[0] = out.astype(o_ref.dtype)


# ----------------------------------------------------------------------------
# Path B: HW-tiled two-pass kernel (stats sweep, then normalize+Swish sweep)
# ----------------------------------------------------------------------------
def _tiled_kernel(p_ref, w_ref, g_ref, b_ref, o_ref, s1_ref, s2_ref,
                  *, G, Cg, inv_n, swish_beta):
    pass_idx = pl.program_id(1)   # 0 = accumulate stats, 1 = normalize + swish
    tile_idx = pl.program_id(2)

    # Conv tile (recomputed in both passes; MXU has slack in this mem-bound op).
    f = jnp.dot(w_ref[...], p_ref[0],
                preferred_element_type=jnp.float32)                # (C4, tile)

    @pl.when(jnp.logical_and(pass_idx == 0, tile_idx == 0))
    def _init():
        s1_ref[...] = jnp.zeros_like(s1_ref)
        s2_ref[...] = jnp.zeros_like(s2_ref)

    @pl.when(pass_idx == 0)
    def _accumulate():
        s1_ref[...] = s1_ref[...] + jnp.sum(f, axis=1, keepdims=True)
        s2_ref[...] = s2_ref[...] + jnp.sum(f * f, axis=1, keepdims=True)

    @pl.when(pass_idx == 1)
    def _normalize():
        out = _gn_swish(f, s1_ref[...], s2_ref[...], g_ref[...], b_ref[...],
                        G=G, Cg=Cg, inv_n=inv_n, swish_beta=swish_beta)
        o_ref[0] = out.astype(o_ref.dtype)


# ----------------------------------------------------------------------------
# Wrapper
# ----------------------------------------------------------------------------
def downsample_unit_pallas(x, params, beta=1.0, *, out_dtype=None,
                           force_hw_tile=None):
    w = params["conv_weight"]                      # (C4, Cin, 2, 2)
    B, Cin, H, W = x.shape
    assert H % 2 == 0 and W % 2 == 0, "kernel_size=2, stride=2 needs even H, W"
    C4 = w.shape[0]
    Cin4 = Cin * 4
    Ho, Wo = H // 2, W // 2
    HW = Ho * Wo
    G = pick_n_groups(C4)
    Cg = C4 // G                                   # always a multiple of 8
    out_dtype = x.dtype if out_dtype is None else out_dtype
    out_bytes = np.dtype(out_dtype).itemsize

    # ---- VMEM budget / tile selection --------------------------------------
    vmem_cap = _vmem_capacity_bytes()
    budget = int(0.75 * vmem_cap)
    # constants (double-buffered by the pipeline): bf16 w2 + f32 gamma/beta
    const_bytes = 2 * (C4 * Cin4 * 2) + 2 * 2 * (C4 * 4)
    # per spatial column: 2x bf16 input, 2x output, ~4 f32 intermediates (f, f*f, y, swish)
    col_bytes = 2 * Cin4 * 2 + 2 * C4 * out_bytes + 4 * C4 * 4

    HW128 = _round_up(HW, 128)                     # lane-dense output width
    if force_hw_tile is not None:
        hw_tile = min(_round_up(int(force_hw_tile), 128), HW128)
    else:
        avail = budget - const_bytes - (1 << 20)
        hw_tile = max(128, min(HW128, (avail // col_bytes) // 128 * 128))
    use_fused = hw_tile >= HW128
    HWp = HW128 if use_fused else _round_up(HW, hw_tile)

    # ---- operand preparation ------------------------------------------------
    # space-to-depth: (B,Cin,H,W) -> (B, Cin*2*2, HW), row order (cin,kh,kw)
    # matches w.reshape(C4, Cin*4).  bf16 for the MXU; zero-pad the spatial
    # axis (zero columns -> zero conv output -> GN stats unaffected).
    patches = (x.reshape(B, Cin, Ho, 2, Wo, 2)
                 .transpose(0, 1, 3, 5, 2, 4)
                 .reshape(B, Cin4, HW)).astype(jnp.bfloat16)
    if HWp != HW:
        patches = jnp.pad(patches, ((0, 0), (0, 0), (0, HWp - HW)))
    w2 = w.reshape(C4, Cin4).astype(jnp.bfloat16)
    gamma = params["gn_gamma"].reshape(C4, 1).astype(jnp.float32)
    bgn = params["gn_beta"].reshape(C4, 1).astype(jnp.float32)

    inv_n = 1.0 / float(Cg * HW)                   # real (unpadded) count

    # ---- grid / specs -------------------------------------------------------
    if use_fused:
        kernel = functools.partial(_fused_kernel, G=G, Cg=Cg, inv_n=inv_n,
                                   swish_beta=float(beta))
        grid = (B,)
        in_specs = [pl.BlockSpec((1, Cin4, HWp), lambda b: (b, 0, 0)),
                    pl.BlockSpec((C4, Cin4), lambda b: (0, 0)),
                    pl.BlockSpec((C4, 1), lambda b: (0, 0)),
                    pl.BlockSpec((C4, 1), lambda b: (0, 0))]
        out_specs = pl.BlockSpec((1, C4, HWp), lambda b: (b, 0, 0))
        scratch = []
        dim_sem = ("parallel",)
        needed = (2 * Cin4 * HWp * 2 + 2 * C4 * HWp * out_bytes
                  + 4 * C4 * HWp * 4 + const_bytes + (1 << 20))
    else:
        T = HWp // hw_tile
        kernel = functools.partial(_tiled_kernel, G=G, Cg=Cg, inv_n=inv_n,
                                   swish_beta=float(beta))
        grid = (B, 2, T)
        in_specs = [pl.BlockSpec((1, Cin4, hw_tile), lambda b, p, t: (b, 0, t)),
                    pl.BlockSpec((C4, Cin4), lambda b, p, t: (0, 0)),
                    pl.BlockSpec((C4, 1), lambda b, p, t: (0, 0)),
                    pl.BlockSpec((C4, 1), lambda b, p, t: (0, 0))]
        # During the stats pass (p==0) all steps map the output to tile 0 and
        # never write it, so no garbage writeback; tile 0 is overwritten with
        # the real result at (p==1, t==0) before its single flush.
        out_specs = pl.BlockSpec((1, C4, hw_tile), lambda b, p, t: (b, 0, t * p))
        scratch = [pltpu.VMEM((C4, 1), jnp.float32),   # per-channel sum
                   pltpu.VMEM((C4, 1), jnp.float32)]   # per-channel sum of squares
        dim_sem = ("parallel", "arbitrary", "arbitrary")
        needed = (2 * Cin4 * hw_tile * 2 + 2 * C4 * hw_tile * out_bytes
                  + 4 * C4 * hw_tile * 4 + 2 * C4 * 4
                  + const_bytes + (1 << 20))

    vmem_limit = int(min(max(needed, 16 * 1024 * 1024), int(0.9 * vmem_cap)))

    def run(allow_fusion):
        cp_kwargs = dict(dimension_semantics=dim_sem, vmem_limit_bytes=vmem_limit)
        if allow_fusion:
            # let XLA fold the space-to-depth relayout / bf16 cast into the
            # kernel's input DMA instead of materializing `patches` in HBM.
            cp_kwargs["allow_input_fusion"] = [True, False, False, False]
        call = pl.pallas_call(
            kernel,
            out_shape=jax.ShapeDtypeStruct((B, C4, HWp), out_dtype),
            grid_spec=pltpu.PrefetchScalarGridSpec(
                num_scalar_prefetch=0, grid=grid,
                in_specs=in_specs, out_specs=out_specs,
                scratch_shapes=scratch),
            compiler_params=pltpu.CompilerParams(**cp_kwargs))
        return call(patches, w2, gamma, bgn)

    try:
        out = run(allow_fusion=True)
    except Exception:
        out = run(allow_fusion=False)   # fusion hint not supported here; plain path

    if HWp != HW:
        out = out[:, :, :HW]            # drop lane padding
    return out.reshape(B, C4, Ho, Wo)   # already channels-first


# ----------------------------------------------------------------------------
# Pure-JAX reference (mirrors the PyTorch forward) for verification
# ----------------------------------------------------------------------------
def downsample_unit_reference(x, params, beta=1.0):
    w = params["conv_weight"]
    C4 = w.shape[0]
    G = pick_n_groups(C4)
    f = lax.conv_general_dilated(
        x.astype(jnp.float32), w.astype(jnp.float32),
        window_strides=(2, 2), padding="VALID",
        dimension_numbers=("NCHW", "OIHW", "NCHW"),
        precision=lax.Precision.HIGHEST)
    B, C, Ho, Wo = f.shape
    fg = f.reshape(B, G, -1)
    mean = fg.mean(axis=2, keepdims=True)
    var = fg.var(axis=2, keepdims=True)            # biased, like torch GroupNorm
    fn = ((fg - mean) / jnp.sqrt(var + _EPS)).reshape(B, C, Ho, Wo)
    fn = (fn * params["gn_gamma"][None, :, None, None]
          + params["gn_beta"][None, :, None, None])
    return fn * jax.nn.sigmoid(beta * fn)


# ----------------------------------------------------------------------------
# Deterministic parameter construction (shapes from DownsampleUnit.__init__)
# ----------------------------------------------------------------------------
def make_params(key, in_channels):
    C4 = in_channels * 4
    k_w, k_g, k_b = jax.random.split(key, 3)
    fan_in = in_channels * 2 * 2
    std = np.sqrt(2.0 / fan_in)                    # kaiming_normal_ (fan_in, relu)
    return {
        # Conv2d(in_channels, 4*in_channels, kernel_size=2, stride=2, bias=False)
        "conv_weight": std * jax.random.normal(k_w, (C4, in_channels, 2, 2),
                                               jnp.float32),
        # nn.GroupNorm defaults are gamma=1 / beta=0; perturb slightly so the
        # affine path is actually exercised by the check.
        "gn_gamma": 1.0 + 0.1 * jax.random.normal(k_g, (C4,), jnp.float32),
        "gn_beta": 0.1 * jax.random.normal(k_b, (C4,), jnp.float32),
    }


if __name__ == "__main__":
    key = jax.random.PRNGKey(0)
    kx1, kx2, kp = jax.random.split(key, 3)

    # Config 1: small shapes -> fused single-block path (HW=64 padded to 128).
    B, Cin, H, W = 2, 4, 16, 16
    params = make_params(kp, Cin)
    x1 = jax.random.normal(kx1, (B, Cin, H, W), jnp.float32)
    out1 = jax.block_until_ready(downsample_unit_pallas(x1, params, beta=1.0))
    ref1 = jax.block_until_ready(downsample_unit_reference(x1, params, beta=1.0))
    assert out1.shape == (B, 4 * Cin, H // 2, W // 2), out1.shape
    np.testing.assert_allclose(np.asarray(out1), np.asarray(ref1),
                               rtol=2e-2, atol=2e-2)

    # Config 2: force the HW-tiled two-pass GroupNorm path (v7x large-HW path).
    x2 = jax.random.normal(kx2, (B, Cin, 32, 32), jnp.float32)
    out2 = jax.block_until_ready(
        downsample_unit_pallas(x2, params, beta=1.0, force_hw_tile=128))
    ref2 = jax.block_until_ready(downsample_unit_reference(x2, params, beta=1.0))
    np.testing.assert_allclose(np.asarray(out2), np.asarray(ref2),
                               rtol=2e-2, atol=2e-2)

    print("KERNEL_OK")
</pallas_src>

<mosaic_0001>
module attributes {stable_mosaic.version = 11 : i64} {
  func.func @_fused_kernel(%arg0: i32, %arg1: memref<1x16x128xbf16, #tpu.memory_space<vmem>>, %arg2: memref<16x16xbf16, #tpu.memory_space<vmem>>, %arg3: memref<16x1xf32, #tpu.memory_space<vmem>>, %arg4: memref<16x1xf32, #tpu.memory_space<vmem>>, %arg5: memref<1x16x128xf32, #tpu.memory_space<vmem>>) attributes {dimension_semantics = [#tpu.dimension_semantics<parallel>], iteration_bounds = array<i64: 2>, scalar_prefetch = 0 : i64, scratch_operands = 0 : i64, tpu.core_type = #tpu.core_type<tc>, window_params = [{transform_indices = @transform_0, window_bounds = array<i64: 1, 16, 128>}, {pipeline_mode = #tpu.pipeline_mode<synchronous>, transform_indices = @transform_1, window_bounds = array<i64: 16, 16>}, {pipeline_mode = #tpu.pipeline_mode<synchronous>, transform_indices = @transform_2, window_bounds = array<i64: 16, 1>}, {pipeline_mode = #tpu.pipeline_mode<synchronous>, transform_indices = @transform_3, window_bounds = array<i64: 16, 1>}, {transform_indices = @transform_4, window_bounds = array<i64: 1, 16, 128>}]} {
    %c0 = arith.constant 0 : index
    %c0_0 = arith.constant 0 : index
    %0 = vector.load %arg2[%c0, %c0_0] : memref<16x16xbf16, #tpu.memory_space<vmem>>, vector<16x16xbf16>
    %c0_1 = arith.constant 0 : index
    %c0_2 = arith.constant 0 : index
    %c0_3 = arith.constant 0 : index
    %1 = vector.load %arg1[%c0_1, %c0_2, %c0_3] : memref<1x16x128xbf16, #tpu.memory_space<vmem>>, vector<1x16x128xbf16>
    %2 = vector.shape_cast %1 : vector<1x16x128xbf16> to vector<16x128xbf16>
    %cst = arith.constant dense<0.000000e+00> : vector<16x128xf32>
    %3 = tpu.matmul %0, %2, %cst {dimension_numbers = #tpu.dot_dimension_numbers<[1], [0], [0], [1], [0, 0, 1, 1], [], []>} : vector<16x16xbf16>, vector<16x128xbf16>, vector<16x128xf32> -> vector<16x128xf32>
    %cst_4 = arith.constant dense<0.000000e+00> : vector<16xf32>
    %4 = vector.multi_reduction <add>, %3, %cst_4 [1] : vector<16x128xf32> to vector<16xf32>
    %5 = vector.shape_cast %4 : vector<16xf32> to vector<16x1xf32>
    %6 = arith.mulf %3, %3 : vector<16x128xf32>
    %cst_5 = arith.constant dense<0.000000e+00> : vector<16xf32>
    %7 = vector.multi_reduction <add>, %6, %cst_5 [1] : vector<16x128xf32> to vector<16xf32>
    %8 = vector.shape_cast %7 : vector<16xf32> to vector<16x1xf32>
    %c0_6 = arith.constant 0 : index
    %c0_7 = arith.constant 0 : index
    %9 = vector.load %arg3[%c0_6, %c0_7] : memref<16x1xf32, #tpu.memory_space<vmem>>, vector<16x1xf32>
    %c0_8 = arith.constant 0 : index
    %c0_9 = arith.constant 0 : index
    %10 = vector.load %arg4[%c0_8, %c0_9] : memref<16x1xf32, #tpu.memory_space<vmem>>, vector<16x1xf32>
    %11 = vector.shape_cast %5 : vector<16x1xf32> to vector<1x16x1xf32>
    %cst_10 = arith.constant dense<0.000000e+00> : vector<1x1xf32>
    %12 = vector.multi_reduction <add>, %11, %cst_10 [1] : vector<1x16x1xf32> to vector<1x1xf32>
    %13 = vector.shape_cast %12 : vector<1x1xf32> to vector<1x1x1xf32>
    %14 = vector.shape_cast %8 : vector<16x1xf32> to vector<1x16x1xf32>
    %cst_11 = arith.constant dense<0.000000e+00> : vector<1x1xf32>
    %15 = vector.multi_reduction <add>, %14, %cst_11 [1] : vector<1x16x1xf32> to vector<1x1xf32>
    %16 = vector.shape_cast %15 : vector<1x1xf32> to vector<1x1x1xf32>
    %cst_12 = arith.constant 9.765625E-4 : f32
    %17 = vector.broadcast %cst_12 : f32 to vector<1x1x1xf32>
    %18 = arith.mulf %13, %17 : vector<1x1x1xf32>
    %cst_13 = arith.constant 9.765625E-4 : f32
    %19 = vector.broadcast %cst_13 : f32 to vector<1x1x1xf32>
    %20 = arith.mulf %16, %19 : vector<1x1x1xf32>
    %21 = arith.mulf %18, %18 : vector<1x1x1xf32>
    %22 = arith.subf %20, %21 : vector<1x1x1xf32>
    %cst_14 = arith.constant 0.000000e+00 : f32
    %23 = vector.broadcast %cst_14 : f32 to vector<1x1x1xf32>
    %24 = arith.maximumf %22, %23 : vector<1x1x1xf32>
    %cst_15 = arith.constant 9.99999974E-6 : f32
    %25 = vector.broadcast %cst_15 : f32 to vector<1x1x1xf32>
    %26 = arith.addf %24, %25 : vector<1x1x1xf32>
    %27 = math.rsqrt %26 : vector<1x1x1xf32>
    %28 = vector.shape_cast %18 : vector<1x1x1xf32> to vector<1x1x1xf32>
    %29 = vector.broadcast %28 : vector<1x1x1xf32> to vector<1x16x1xf32>
    %30 = vector.shape_cast %29 : vector<1x16x1xf32> to vector<16x1xf32>
    %31 = vector.shape_cast %27 : vector<1x1x1xf32> to vector<1x1x1xf32>
    %32 = vector.broadcast %31 : vector<1x1x1xf32> to vector<1x16x1xf32>
    %33 = vector.shape_cast %32 : vector<1x16x1xf32> to vector<16x1xf32>
    %34 = vector.broadcast %30 : vector<16x1xf32> to vector<16x128xf32>
    %35 = arith.subf %3, %34 : vector<16x128xf32>
    %36 = arith.mulf %33, %9 : vector<16x1xf32>
    %37 = vector.broadcast %36 : vector<16x1xf32> to vector<16x128xf32>
    %38 = arith.mulf %35, %37 : vector<16x128xf32>
    %39 = vector.broadcast %10 : vector<16x1xf32> to vector<16x128xf32>
    %40 = arith.addf %38, %39 : vector<16x128xf32>
    %cst_16 = arith.constant 1.000000e+00 : f32
    %41 = vector.broadcast %cst_16 : f32 to vector<16x128xf32>
    %42 = arith.mulf %41, %40 : vector<16x128xf32>
    %43 = arith.negf %42 : vector<16x128xf32>
    %44 = math.exp %43 : vector<16x128xf32>
    %cst_17 = arith.constant 1.000000e+00 : f32
    %45 = vector.broadcast %cst_17 : f32 to vector<16x128xf32>
    %46 = arith.addf %45, %44 : vector<16x128xf32>
    %47 = arith.divf %45, %46 : vector<16x128xf32>
    %48 = arith.mulf %40, %47 : vector<16x128xf32>
    %c0_18 = arith.constant 0 : index
    %c0_19 = arith.constant 0 : index
    %c0_20 = arith.constant 0 : index
    %49 = vector.load %arg5[%c0_18, %c0_19, %c0_20] : memref<1x16x128xf32, #tpu.memory_space<vmem>>, vector<1x16x128xf32>
    %50 = vector.shape_cast %49 : vector<1x16x128xf32> to vector<16x128xf32>
    %51 = vector.shape_cast %48 : vector<16x128xf32> to vector<1x16x128xf32>
    tpu.vector_store %arg5[%c0_18, %c0_19, %c0_20], %51 {strides = array<i32>} : memref<1x16x128xf32, #tpu.memory_space<vmem>>, vector<1x16x128xf32>,
    return
  }
  func.func @transform_0(%arg0: i32) -> (i32, i32, i32) {
    %c0_i32 = arith.constant 0 : i32
    %c0_i32_0 = arith.constant 0 : i32
    %c0_i32_1 = arith.constant 0 : i32
    return %arg0, %c0_i32, %c0_i32_0 : i32, i32, i32
  }
  func.func @transform_1(%arg0: i32) -> (i32, i32) {
    %c0_i32 = arith.constant 0 : i32
    %c0_i32_0 = arith.constant 0 : i32
    %c0_i32_1 = arith.constant 0 : i32
    return %c0_i32, %c0_i32_0 : i32, i32
  }
  func.func @transform_2(%arg0: i32) -> (i32, i32) {
    %c0_i32 = arith.constant 0 : i32
    %c0_i32_0 = arith.constant 0 : i32
    %c0_i32_1 = arith.constant 0 : i32
    return %c0_i32, %c0_i32_0 : i32, i32
  }
  func.func @transform_3(%arg0: i32) -> (i32, i32) {
    %c0_i32 = arith.constant 0 : i32
    %c0_i32_0 = arith.constant 0 : i32
    %c0_i32_1 = arith.constant 0 : i32
    return %c0_i32, %c0_i32_0 : i32, i32
  }
  func.func @transform_4(%arg0: i32) -> (i32, i32, i32) {
    %c0_i32 = arith.constant 0 : i32
    %c0_i32_0 = arith.constant 0 : i32
    %c0_i32_1 = arith.constant 0 : i32
    return %arg0, %c0_i32, %c0_i32_0 : i32, i32, i32
  }
}

module attributes {stable_mosaic.version = 11 : i64} {
  func.func @_fused_kernel(%arg0: i32, %arg1: memref<1x16x128xbf16, #tpu.memory_space<vmem>>, %arg2: memref<16x16xbf16, #tpu.memory_space<vmem>>, %arg3: memref<16x1xf32, #tpu.memory_space<vmem>>, %arg4: memref<16x1xf32, #tpu.memory_space<vmem>>, %arg5: memref<1x16x128xf32, #tpu.memory_space<vmem>>) attributes {dimension_semantics = [#tpu.dimension_semantics<parallel>], iteration_bounds = array<i64: 2>, scalar_prefetch = 0 : i64, scratch_operands = 0 : i64, tpu.core_type = #tpu.core_type<tc>, window_params = [{transform_indices = @transform_0, window_bounds = array<i64: 1, 16, 128>}, {pipeline_mode = #tpu.pipeline_mode<synchronous>, transform_indices = @transform_1, window_bounds = array<i64: 16, 16>}, {pipeline_mode = #tpu.pipeline_mode<synchronous>, transform_indices = @transform_2, window_bounds = array<i64: 16, 1>}, {pipeline_mode = #tpu.pipeline_mode<synchronous>, transform_indices = @transform_3, window_bounds = array<i64: 16, 1>}, {transform_indices = @transform_4, window_bounds = array<i64: 1, 16, 128>}]} {
    %c0 = arith.constant 0 : index
    %c0_0 = arith.constant 0 : index
    %0 = vector.load %arg2[%c0, %c0_0] : memref<16x16xbf16, #tpu.memory_space<vmem>>, vector<16x16xbf16>
    %c0_1 = arith.constant 0 : index
    %c0_2 = arith.constant 0 : index
    %c0_3 = arith.constant 0 : index
    %1 = vector.load %arg1[%c0_1, %c0_2, %c0_3] : memref<1x16x128xbf16, #tpu.memory_space<vmem>>, vector<1x16x128xbf16>
    %2 = vector.shape_cast %1 : vector<1x16x128xbf16> to vector<16x128xbf16>
    %cst = arith.constant dense<0.000000e+00> : vector<16x128xf32>
    %3 = tpu.matmul %0, %2, %cst {dimension_numbers = #tpu.dot_dimension_numbers<[1], [0], [0], [1], [0, 0, 1, 1], [], []>} : vector<16x16xbf16>, vector<16x128xbf16>, vector<16x128xf32> -> vector<16x128xf32>
    %cst_4 = arith.constant dense<0.000000e+00> : vector<16xf32>
    %4 = vector.multi_reduction <add>, %3, %cst_4 [1] : vector<16x128xf32> to vector<16xf32>
    %5 = vector.shape_cast %4 : vector<16xf32> to vector<16x1xf32>
    %6 = arith.mulf %3, %3 : vector<16x128xf32>
    %cst_5 = arith.constant dense<0.000000e+00> : vector<16xf32>
    %7 = vector.multi_reduction <add>, %6, %cst_5 [1] : vector<16x128xf32> to vector<16xf32>
    %8 = vector.shape_cast %7 : vector<16xf32> to vector<16x1xf32>
    %c0_6 = arith.constant 0 : index
    %c0_7 = arith.constant 0 : index
    %9 = vector.load %arg3[%c0_6, %c0_7] : memref<16x1xf32, #tpu.memory_space<vmem>>, vector<16x1xf32>
    %c0_8 = arith.constant 0 : index
    %c0_9 = arith.constant 0 : index
    %10 = vector.load %arg4[%c0_8, %c0_9] : memref<16x1xf32, #tpu.memory_space<vmem>>, vector<16x1xf32>
    %11 = vector.shape_cast %5 : vector<16x1xf32> to vector<1x16x1xf32>
    %cst_10 = arith.constant dense<0.000000e+00> : vector<1x1xf32>
    %12 = vector.multi_reduction <add>, %11, %cst_10 [1] : vector<1x16x1xf32> to vector<1x1xf32>
    %13 = vector.shape_cast %12 : vector<1x1xf32> to vector<1x1x1xf32>
    %14 = vector.shape_cast %8 : vector<16x1xf32> to vector<1x16x1xf32>
    %cst_11 = arith.constant dense<0.000000e+00> : vector<1x1xf32>
    %15 = vector.multi_reduction <add>, %14, %cst_11 [1] : vector<1x16x1xf32> to vector<1x1xf32>
    %16 = vector.shape_cast %15 : vector<1x1xf32> to vector<1x1x1xf32>
    %cst_12 = arith.constant 9.765625E-4 : f32
    %17 = vector.broadcast %cst_12 : f32 to vector<1x1x1xf32>
    %18 = arith.mulf %13, %17 : vector<1x1x1xf32>
    %cst_13 = arith.constant 9.765625E-4 : f32
    %19 = vector.broadcast %cst_13 : f32 to vector<1x1x1xf32>
    %20 = arith.mulf %16, %19 : vector<1x1x1xf32>
    %21 = arith.mulf %18, %18 : vector<1x1x1xf32>
    %22 = arith.subf %20, %21 : vector<1x1x1xf32>
    %cst_14 = arith.constant 0.000000e+00 : f32
    %23 = vector.broadcast %cst_14 : f32 to vector<1x1x1xf32>
    %24 = arith.maximumf %22, %23 : vector<1x1x1xf32>
    %cst_15 = arith.constant 9.99999974E-6 : f32
    %25 = vector.broadcast %cst_15 : f32 to vector<1x1x1xf32>
    %26 = arith.addf %24, %25 : vector<1x1x1xf32>
    %27 = math.rsqrt %26 : vector<1x1x1xf32>
    %28 = vector.shape_cast %18 : vector<1x1x1xf32> to vector<1x1x1xf32>
    %29 = vector.broadcast %28 : vector<1x1x1xf32> to vector<1x16x1xf32>
    %30 = vector.shape_cast %29 : vector<1x16x1xf32> to vector<16x1xf32>
    %31 = vector.shape_cast %27 : vector<1x1x1xf32> to vector<1x1x1xf32>
    %32 = vector.broadcast %31 : vector<1x1x1xf32> to vector<1x16x1xf32>
    %33 = vector.shape_cast %32 : vector<1x16x1xf32> to vector<16x1xf32>
    %34 = vector.broadcast %30 : vector<16x1xf32> to vector<16x128xf32>
    %35 = arith.subf %3, %34 : vector<16x128xf32>
    %36 = arith.mulf %33, %9 : vector<16x1xf32>
    %37 = vector.broadcast %36 : vector<16x1xf32> to vector<16x128xf32>
    %38 = arith.mulf %35, %37 : vector<16x128xf32>
    %39 = vector.broadcast %10 : vector<16x1xf32> to vector<16x128xf32>
    %40 = arith.addf %38, %39 : vector<16x128xf32>
    %cst_16 = arith.constant 1.000000e+00 : f32
    %41 = vector.broadcast %cst_16 : f32 to vector<16x128xf32>
    %42 = arith.mulf %41, %40 : vector<16x128xf32>
    %43 = arith.negf %42 : vector<16x128xf32>
    %44 = math.exp %43 : vector<16x128xf32>
    %cst_17 = arith.constant 1.000000e+00 : f32
    %45 = vector.broadcast %cst_17 : f32 to vector<16x128xf32>
    %46 = arith.addf %45, %44 : vector<16x128xf32>
    %47 = arith.divf %45, %46 : vector<16x128xf32>
    %48 = arith.mulf %40, %47 : vector<16x128xf32>
    %c0_18 = arith.constant 0 : index
    %c0_19 = arith.constant 0 : index
    %c0_20 = arith.constant 0 : index
    %49 = vector.load %arg5[%c0_18, %c0_19, %c0_20] : memref<1x16x128xf32, #tpu.memory_space<vmem>>, vector<1x16x128xf32>
    %50 = vector.shape_cast %49 : vector<1x16x128xf32> to vector<16x128xf32>
    %51 = vector.shape_cast %48 : vector<16x128xf32> to vector<1x16x128xf32>
    tpu.vector_store %arg5[%c0_18, %c0_19, %c0_20], %51 {strides = array<i32>} : memref<1x16x128xf32, #tpu.memory_space<vmem>>, vector<1x16x128xf32>,
    return
  }
  func.func @transform_0(%arg0: i32) -> (i32, i32, i32) {
    %c0_i32 = arith.constant 0 : i32
    %c0_i32_0 = arith.constant 0 : i32
    %c0_i32_1 = arith.constant 0 : i32
    return %arg0, %c0_i32, %c0_i32_0 : i32, i32, i32
  }
  func.func @transform_1(%arg0: i32) -> (i32, i32) {
    %c0_i32 = arith.constant 0 : i32
    %c0_i32_0 = arith.constant 0 : i32
    %c0_i32_1 = arith.constant 0 : i32
    return %c0_i32, %c0_i32_0 : i32, i32
  }
  func.func @transform_2(%arg0: i32) -> (i32, i32) {
    %c0_i32 = arith.constant 0 : i32
    %c0_i32_0 = arith.constant 0 : i32
    %c0_i32_1 = arith.constant 0 : i32
    return %c0_i32, %c0_i32_0 : i32, i32
  }
  func.func @transform_3(%arg0: i32) -> (i32, i32) {
    %c0_i32 = arith.constant 0 : i32
    %c0_i32_0 = arith.constant 0 : i32
    %c0_i32_1 = arith.constant 0 : i32
    return %c0_i32, %c0_i32_0 : i32, i32
  }
  func.func @transform_4(%arg0: i32) -> (i32, i32, i32) {
    %c0_i32 = arith.constant 0 : i32
    %c0_i32_0 = arith.constant 0 : i32
    %c0_i32_1 = arith.constant 0 : i32
    return %arg0, %c0_i32, %c0_i32_0 : i32, i32, i32
  }
}

</mosaic_0001>

<llo_original>
// kernel: tpu_custom_call.1
$region0: #{tpu_custom_call.1}
  #allocation0 [shape = 'u32[]', space=smem, size = 0x4, offset = 0x4, fixed_abs, tag = 'smem constant byte address 0x4 - core index']
  #allocation1 [shape = 'u32[144,128]{1,0:T(1,128)}', space=vmem, size = 0x12000, scoped, tag = 'internal scratch']
  %s0 = inlined_call_operand.vmem [shape: bf16[2,16,128], index: 0, kind: input, shape index: {}]
  %s1 = inlined_call_operand.vmem [shape: bf16[16,16], index: 1, kind: input, shape index: {}]
  %s2 = inlined_call_operand.vmem [shape: f32[16,1], index: 2, kind: input, shape index: {}]
  %s3 = inlined_call_operand.vmem [shape: f32[16,1], index: 3, kind: input, shape index: {}]
  %s4 = inlined_call_operand.hbm [shape: f32[2,16,128], index: 4, kind: output, shape index: {}]
  %s5 = sld [smem:[#allocation0]]
  $region49: #{tpu_custom_call.1} parent=0
    _
  %s7 = ssub.s32 1, %s5
  %s8 = scalar_select 0, %s7, %s5
  $region1: #{tpu_custom_call.1} parent=0
    #allocation2 [shape = 'u8[16384]{0}', space=vmem, size = 0x4000, scoped, tag = 'output window, operand 0']
    #allocation3 [shape = 's32[2]{0}', space=sflag, size = 0x8, scoped, tag = 'scoped memory for tpu_custom_call.1']
    %9 = vsyncpa [#allocation3], 0
    %s10 = scalar_lea.sflag [#allocation3], 1
    %11 = vsyncpa %s10, 0
    loop: start=0, step=1, limit=4
    $region2: #{tpu_custom_call.1} parent=1 // loop_pre_header
      _
    $region3: #{tpu_custom_call.1} parent=1 // loop_header
      %s13 = sphi 0, %s17
      %p14 = scmp.ge.s32.totalorder %s13, 4
      %s23 = sphi 0, %s25
      %s26 = sphi 0, %s23
      %s27 = sphi 0, %s26
      %s43 = sphi 0, %s27
      %s47 = sphi 0, %s47
      %s49 = sphi 0, %s47
      %s50 = sphi 0, %s49
      %s64 = sphi 0, %s50
      %s68 = sphi 0, %s68
      %s70 = sphi 0, %s68
      %s71 = sphi 0, %s70
      %s85 = sphi 0, %s71
      %s89 = sphi 0, %s89
      %s91 = sphi 0, %s89
      %s92 = sphi 0, %s91
      %s106 = sphi 0, %s92
      %s112 = sphi 0, %s114
      %s115 = sphi 0, %s112
      %s116 = sphi 0, %s115
      %s132 = sphi 0, %s116
    $region4: #{tpu_custom_call.1} parent=1 // loop_header_branch
      %16 = sbr.rel (%p14) target = $region8
    $region5: #{tpu_custom_call.1} parent=1 // loop_body
      %s18 = ssub.s32 %s13, 1
      %s19 = ssub.s32 %s13, 2
      %s20 = sadd.s32 %s13, 1
      %s21 = ssub.s32 %s13, %s20
      %p22 = scmp.eq.s32.totalorder %s21, 0
      %s24 = sadd.s32 %s23, 1
      %s25 = scalar_select %p22, %s23, %s24
      %p28 = pneg %p22
      %p29 = scmp.eq.s32.totalorder %s13, 1
      %p30 = por %p28, %p29
      %p31 = scmp.ne.s32.totalorder %s23, %s26
      %p32 = scmp.eq.s32.totalorder %s13, 0
      %p33 = por %p31, %p32
      %p34 = scmp.ne.s32.totalorder %s23, %s26
      %p35 = scmp.eq.s32.totalorder %s18, 1
      %p36 = por %p34, %p35
      %p37 = scmp.ne.s32.totalorder %s26, %s27
      %p38 = scmp.eq.s32.totalorder %s18, 0
      %p39 = por %p37, %p38
      %p40 = scmp.ne.s32.totalorder %s26, %s27
      %p41 = scmp.eq.s32.totalorder %s19, 1
      %p42 = por %p40, %p41
      %p44 = scmp.ne.s32.totalorder %s27, %s43
      %p45 = scmp.eq.s32.totalorder %s19, 0
      %p46 = por %p44, %p45
      %s48 = sadd.s32 %s47, 1
      %p51 = scmp.eq.s32.totalorder %s13, 1
      %p52 = scmp.ne.s32.totalorder %s47, %s49
      %p53 = scmp.eq.s32.totalorder %s13, 0
      %p54 = por %p52, %p53
      %p55 = scmp.ne.s32.totalorder %s47, %s49
      %p56 = scmp.eq.s32.totalorder %s18, 1
      %p57 = por %p55, %p56
      %p58 = scmp.ne.s32.totalorder %s49, %s50
      %p59 = scmp.eq.s32.totalorder %s18, 0
      %p60 = por %p58, %p59
      %p61 = scmp.ne.s32.totalorder %s49, %s50
      %p62 = scmp.eq.s32.totalorder %s19, 1
      %p63 = por %p61, %p62
      %p65 = scmp.ne.s32.totalorder %s50, %s64
      %p66 = scmp.eq.s32.totalorder %s19, 0
      %p67 = por %p65, %p66
      %s69 = sadd.s32 %s68, 1
      %p72 = scmp.eq.s32.totalorder %s13, 1
      %p73 = scmp.ne.s32.totalorder %s68, %s70
      %p74 = scmp.eq.s32.totalorder %s13, 0
      %p75 = por %p73, %p74
      %p76 = scmp.ne.s32.totalorder %s68, %s70
      %p77 = scmp.eq.s32.totalorder %s18, 1
      %p78 = por %p76, %p77
      %p79 = scmp.ne.s32.totalorder %s70, %s71
      %p80 = scmp.eq.s32.totalorder %s18, 0
      %p81 = por %p79, %p80
      %p82 = scmp.ne.s32.totalorder %s70, %s71
      %p83 = scmp.eq.s32.totalorder %s19, 1
      %p84 = por %p82, %p83
      %p86 = scmp.ne.s32.totalorder %s71, %s85
      %p87 = scmp.eq.s32.totalorder %s19, 0
      %p88 = por %p86, %p87
      %s90 = sadd.s32 %s89, 1
      %p93 = scmp.eq.s32.totalorder %s13, 1
      %p94 = scmp.ne.s32.totalorder %s89, %s91
      %p95 = scmp.eq.s32.totalorder %s13, 0
      %p96 = por %p94, %p95
      %p97 = scmp.ne.s32.totalorder %s89, %s91
      %p98 = scmp.eq.s32.totalorder %s18, 1
      %p99 = por %p97, %p98
      %p100 = scmp.ne.s32.totalorder %s91, %s92
      %p101 = scmp.eq.s32.totalorder %s18, 0
      %p102 = por %p100, %p101
      %p103 = scmp.ne.s32.totalorder %s91, %s92
      %p104 = scmp.eq.s32.totalorder %s19, 1
      %p105 = por %p103, %p104
      %p107 = scmp.ne.s32.totalorder %s92, %s106
      %p108 = scmp.eq.s32.totalorder %s19, 0
      %p109 = por %p107, %p108
      %s110 = ssub.s32 %s13, %s20
      %p111 = scmp.eq.s32.totalorder %s110, 0
      %s113 = sadd.s32 %s112, 1
      %s114 = scalar_select %p111, %s112, %s113
      %p117 = pneg %p111
      %p118 = scmp.eq.s32.totalorder %s13, 1
      %p119 = por %p117, %p118
      %p120 = scmp.ne.s32.totalorder %s112, %s115
      %p121 = scmp.eq.s32.totalorder %s13, 0
      %p122 = por %p120, %p121
      %p123 = scmp.ne.s32.totalorder %s112, %s115
      %p124 = scmp.eq.s32.totalorder %s18, 1
      %p125 = por %p123, %p124
      %p126 = scmp.ne.s32.totalorder %s115, %s116
      %p127 = scmp.eq.s32.totalorder %s18, 0
      %p128 = por %p126, %p127
      %p129 = scmp.ne.s32.totalorder %s115, %s116
      %p130 = scmp.eq.s32.totalorder %s19, 1
      %p131 = por %p129, %p130
      %p133 = scmp.ne.s32.totalorder %s116, %s132
      %p134 = scmp.eq.s32.totalorder %s19, 0
      %p135 = por %p133, %p134
      %p136 = scmp.le.s32.totalorder 1, %s13
      %p137 = scmp.lt.s32.totalorder %s13, 3
      %p138 = pnand %p136, %p137
      %p139 = pneg %p138
      // Predicated region
      $region9: #{tpu_custom_call.1} parent=5 // pred_check
        _
      $region10: #{tpu_custom_call.1} parent=5 // pred_check_branch
        %141 = sbr.rel (%p138) target = $region12
      $region11: #{tpu_custom_call.1} parent=5 // pred_region
        %s142 = ssub.s32 %s13, 1
        // Predicated region
        $region13: #{tpu_custom_call.1} parent=11 // pred_check
          %p143 = pneg %p60
        $region14: #{tpu_custom_call.1} parent=11 // pred_check_branch
          %145 = sbr.rel (%p143) target = $region16
        $region15: #{tpu_custom_call.1} parent=11 // pred_region
          _
        $region16: #{tpu_custom_call.1} parent=11 // pred_fallthru
          _
        // Predicated region
        $region17: #{tpu_custom_call.1} parent=11 // pred_check
          %p146 = pneg %p81
        $region18: #{tpu_custom_call.1} parent=11 // pred_check_branch
          %148 = sbr.rel (%p146) target = $region20
        $region19: #{tpu_custom_call.1} parent=11 // pred_region
          _
        $region20: #{tpu_custom_call.1} parent=11 // pred_fallthru
          _
        // Predicated region
        $region21: #{tpu_custom_call.1} parent=11 // pred_check
          %p149 = pneg %p102
        $region22: #{tpu_custom_call.1} parent=11 // pred_check_branch
          %151 = sbr.rel (%p149) target = $region24
        $region23: #{tpu_custom_call.1} parent=11 // pred_region
          _
        $region24: #{tpu_custom_call.1} parent=11 // pred_fallthru
          _
      $region12: #{tpu_custom_call.1} parent=5 // pred_fallthru
        _
      %p152 = scmp.lt.s32.totalorder %s13, 2
      // Predicated region
      $region25: #{tpu_custom_call.1} parent=5 // pred_check
        %p153 = pneg %p152
      $region26: #{tpu_custom_call.1} parent=5 // pred_check_branch
        %155 = sbr.rel (%p153) target = $region28
      $region27: #{tpu_custom_call.1} parent=5 // pred_region
        // Predicated region
        $region29: #{tpu_custom_call.1} parent=27 // pred_check
          %p156 = pneg %p33
        $region30: #{tpu_custom_call.1} parent=27 // pred_check_branch
          %158 = sbr.rel (%p156) target = $region32
        $region31: #{tpu_custom_call.1} parent=27 // pred_region
          %p159 = scmp.lt.s32.totalorder %s13, 1
          %s160 = scalar_select %p159, %s13, 1
          %s161 = smul.addr %s160, 2
          %s162 = smul.addr %s161, 4
          %s163 = scalar_lea.vmem %s0, %s162
        $region32: #{tpu_custom_call.1} parent=27 // pred_fallthru
          _
      $region28: #{tpu_custom_call.1} parent=5 // pred_fallthru
        _
      %p164 = scmp.le.s32.totalorder 1, %s13
      %p165 = scmp.lt.s32.totalorder %s13, 3
      %p166 = pnand %p164, %p165
      %p167 = pneg %p166
      // Predicated region
      $region33: #{tpu_custom_call.1} parent=5 // pred_check
        _
      $region34: #{tpu_custom_call.1} parent=5 // pred_check_branch
        %169 = sbr.rel (%p166) target = $region36
      $region35: #{tpu_custom_call.1} parent=5 // pred_region
        %s170 = ssub.s32 %s13, 1
        %p171 = scmp.lt.s32.totalorder %s18, 1
        %s172 = scalar_select %p171, %s18, 1
        %s173 = smul.addr %s172, 2
        %s174 = smul.addr %s173, 4
        %s175 = scalar_lea.vmem %s0, %s174
        %p176 = pneg %p39
        %p177 = pneg %p36
        %p178 = pneg %p60
        %p179 = pneg %p57
        %p180 = pneg %p81
        %p181 = pneg %p78
        %p182 = pneg %p102
        %p183 = pneg %p99
        %p184 = pneg %p128
        %p185 = pneg %p125
        %s186 = sand.u32 %s115, 1
        %s187 = scalar_lea.sflag [#allocation3], %s186
        %s188 = sand.u32 %s115, 1
        %s189 = smul.addr %s188, 16
        %s190 = scalar_lea.vmem [#allocation2], %s189
        %p191 = scmp.lt.s32.totalorder %s18, 1
        %s192 = scalar_select %p191, %s18, 1
        %s193 = smul.addr %s192, 2
        %s194 = smul.addr %s193, 4
        %s195 = scalar_lea.vmem %s0, %s194
        %v197 = vld [vmem:[%s1] sm:$0xf]
        %v198 = vld [vmem:[%s1 + $0x4] sm:$0xf]
        %v199 = vld [vmem:[%s195] sm:$0xf]
        %v200 = vld [vmem:[%s195 + $0x4] sm:$0xf]
        %v203 = vunpack.c.l.b16 %v197
        %v204 = vunpack.c.l.b16 %v198
        %v205 = vpack.c.b16 %v204, %v203
        %v208 = vunpack.c.l.b16 %v199
        %v209 = vunpack.c.l.b16 %v200
        %v210 = vpack.c.b16 %v209, %v208
        %vm212 = vcmask 130048
        %v214 = vsel %vm212, %v205, 0
        %216 = vmatprep.subr.bf16.mxu0 0
        %217 = vmatpush1.bf16.msra.mxu0 %v210
        %218 = vmatprep.subr.bf16.mxu0 0
        %219 = vmatpush1.bf16.msra.mxu0 0
        %220 = vmatprep.subr.bf16.mxu0 0
        %221 = vmatpush1.bf16.msra.mxu0 0
        %222 = vmatprep.subr.bf16.mxu0 0
        %223 = vmatpush1.bf16.msra.mxu0 0
        %224 = vmatprep.subr.bf16.mxu0 0
        %225 = vmatpush1.bf16.msra.mxu0 0
        %226 = vmatprep.subr.bf16.mxu0 0
        %227 = vmatpush1.bf16.msra.mxu0 0
        %228 = vmatprep.subr.bf16.mxu0 0
        %229 = vmatpush1.bf16.msra.mxu0 0
        %230 = vmatprep.subr.bf16.mxu0 0
        %231 = vmatpush1.bf16.msra.mxu0 0
        %232 = vmatprep.subr.bf16.mxu0 0
        %233 = vmatpush1.bf16.msra.mxu0 0
        %234 = vmatprep.subr.bf16.mxu0 0
        %235 = vmatpush1.bf16.msra.mxu0 0
        %236 = vmatprep.subr.bf16.mxu0 0
        %237 = vmatpush1.bf16.msra.mxu0 0
        %238 = vmatprep.subr.bf16.mxu0 0
        %239 = vmatpush1.bf16.msra.mxu0 0
        %240 = vmatprep.subr.bf16.mxu0 0
        %241 = vmatpush1.bf16.msra.mxu0 0
        %242 = vmatprep.subr.bf16.mxu0 0
        %243 = vmatpush1.bf16.msra.mxu0 0
        %244 = vmatprep.subr.bf16.mxu0 0
        %245 = vmatpush1.bf16.msra.mxu0 0
        %246 = vmatprep.subr.bf16.mxu0 0
        %247 = vmatpush1.bf16.msra.mxu0 0
        %248 = vmatprep.mubr.bf16.mxu0 0
        %249 = vmatmul.mubr.bf16.gmra.mrb[0].mxu0 %v214
        %v250 = vpop.f32.mrb[0].mxu0
        %v251 = vadd.f32 0.0, %v250
        %v252 = vpop.f32.mrb[0].mxu0
        %v253 = vpop.f32.mrb[0].mxu0
        %v254 = vadd.f32 0.0, %v253
        %v255 = vpop.f32.mrb[0].mxu0
        %256 = vdwg.mxu0
        %257 = vadd.xlane.f32.xlu0 %v251
        %v258 = vpop.xlane.xlu0 %257
        %259 = vadd.xlane.f32.xlu0 %v254
        %v260 = vpop.xlane.xlu0 %259
        %v261 = vmul.f32 %v251, %v251
        %v262 = vmul.f32 %v254, %v254
        %263 = vadd.xlane.f32.xlu0 %v261
        %v264 = vpop.xlane.xlu0 %263
        %265 = vadd.xlane.f32.xlu0 %v262
        %v266 = vpop.xlane.xlu0 %265
        %v267 = vld [vmem:[%s2] sm:$0xff]
        %v268 = vld [vmem:[%s2 + $0x8] sm:$0xff]
        %v269 = vld [vmem:[%s3] sm:$0xff]
        %v270 = vld [vmem:[%s3 + $0x8] sm:$0xff]
        %v271 = vadd.f32 %v258, %v260
        %v272 = vrot.slane %v271, 4
        %v273 = vadd.f32 %v271, %v272
        %v274 = vrot.slane %v273, 2
        %v275 = vadd.f32 %v273, %v274
        %v276 = vrot.slane %v275, 1
        %v277 = vadd.f32 %v275, %v276
        %v278 = vadd.f32 %v264, %v266
        %v279 = vrot.slane %v278, 4
        %v280 = vadd.f32 %v278, %v279
        %v281 = vrot.slane %v280, 2
        %v282 = vadd.f32 %v280, %v281
        %v283 = vrot.slane %v282, 1
        %v284 = vadd.f32 %v282, %v283
        %v285 = vmul.f32 %v277, 0.0009765625
        %v286 = vmul.f32 %v284, 0.0009765625
        %v287 = vmul.f32 %v285, %v285
        %v288 = vsub.f32 %v286, %v287
        %v289 = vmax.f32 %v288, 0.0
        %v290 = vadd.f32 %v289, 1e-05
        %v291 = vrsqrt.pop %v290
        %v292 = vsub.f32 %v251, %v285
        %v293 = vsub.f32 %v254, %v285
        %v294 = vmul.f32 %v291, %v267
        %v295 = vmul.f32 %v291, %v268
        %297 = vset.pattern.permute.xlu0 0
        %298 = vperm.xlu0 %297, %v294
        %v299 = vpop.permute.xlu0 %298
        %302 = vset.pattern.permute.xlu0 0
        %303 = vperm.xlu0 %302, %v295
        %v304 = vpop.permute.xlu0 %303
        %v306 = vmul.f32 %v292, %v299
        %v307 = vmul.f32 %v293, %v304
        %309 = vset.pattern.permute.xlu0 0
        %310 = vperm.xlu0 %309, %v269
        %v311 = vpop.permute.xlu0 %310
        %314 = vset.pattern.permute.xlu0 0
        %315 = vperm.xlu0 %314, %v270
        %v316 = vpop.permute.xlu0 %315
        %v318 = vadd.f32 %v306, %v311
        %v319 = vadd.f32 %v307, %v316
        %v320 = vxor.u32 %v318, 2147483648
        %v321 = vxor.u32 %v319, 2147483648
        %v322 = vmul.f32 %v320, 1.442695
        %v323 = vpow.pop %v322
        %v324 = vmul.f32 %v321, 1.442695
        %v325 = vpow.pop %v324
        %v326 = vadd.f32 %v323, 1.0
        %v327 = vadd.f32 %v325, 1.0
        %v328 = vrcp.pop %v326
        %v329 = vmul.f32 1.0, %v328
        %v330 = vrcp.pop %v327
        %v331 = vmul.f32 1.0, %v330
        %v332 = vmul.f32 %v318, %v329
        %v333 = vmul.f32 %v319, %v331
        %334 = vst [vmem:[%s190] sm:$0xff] %v332
        %335 = vst [vmem:[%s190 + $0x8] sm:$0xff] %v333
        %s336 = sand.u32 %s115, 1
        %s337 = scalar_lea.sflag [#allocation3], %s336
        %s338 = sand.u32 %s115, 1
        %s339 = smul.addr %s338, 16
        %s340 = scalar_lea.vmem [#allocation2], %s339
        // Predicated region
        $region37: #{tpu_custom_call.1} parent=35 // pred_check
          %p341 = pneg %p125
        $region38: #{tpu_custom_call.1} parent=35 // pred_check_branch
          %343 = sbr.rel (%p341) target = $region40
        $region39: #{tpu_custom_call.1} parent=35 // pred_region
          %s345 = ssub.s32 256, 256
          %346 = vsyncadd %s337, %s345
          %s347 = smul.addr %s18, 2
          %s348 = smul.addr %s347, 128
          %s349 = scalar_lea.hbm %s4, %s348
          %s350 = sshll.u32 %s340, 4
          %s351 = int_to_ptr.vmem [resolvable:$true] %s350
          %356 = dma.vmem_to_hbm [thread:$0]  %s351, 256, %s349, %s337, 128, 128, 8
        $region40: #{tpu_custom_call.1} parent=35 // pred_fallthru
          _
      $region36: #{tpu_custom_call.1} parent=5 // pred_fallthru
        _
      %p357 = scmp.le.s32.totalorder 2, %s13
      // Predicated region
      $region41: #{tpu_custom_call.1} parent=5 // pred_check
        %p358 = pneg %p357
      $region42: #{tpu_custom_call.1} parent=5 // pred_check_branch
        %360 = sbr.rel (%p358) target = $region44
      $region43: #{tpu_custom_call.1} parent=5 // pred_region
        %s361 = ssub.s32 %s13, 2
        // Predicated region
        $region45: #{tpu_custom_call.1} parent=43 // pred_check
          %p362 = pneg %p131
        $region46: #{tpu_custom_call.1} parent=43 // pred_check_branch
          %364 = sbr.rel (%p362) target = $region48
        $region47: #{tpu_custom_call.1} parent=43 // pred_region
          %s365 = sand.u32 %s116, 1
          %s366 = scalar_lea.sflag [#allocation3], %s365
          %s367 = sand.u32 %s116, 1
          %s368 = smul.addr %s367, 16
          %s369 = scalar_lea.vmem [#allocation2], %s368
          %370 = dma.done %s366, 256
        $region48: #{tpu_custom_call.1} parent=43 // pred_fallthru
          _
      $region44: #{tpu_custom_call.1} parent=5 // pred_fallthru
        _
    $region6: #{tpu_custom_call.1} parent=1 // loop_footer
      %s17 = sadd.s32 1, %s13
    $region7: #{tpu_custom_call.1} parent=1 // loop_footer_branch
      %12 = sbr.rel target = $region3
    $region8: #{tpu_custom_call.1} parent=1 // loop_exit
      _
    %371 = vsyncpa [#allocation3], 1
    %s372 = scalar_lea.sflag [#allocation3], 1
    %373 = vsyncpa %s372, 1

// kernel: tpu_custom_call.1
$region0: #{tpu_custom_call.1}
  #allocation0 [shape = 'u32[]', space=smem, size = 0x4, offset = 0x4, fixed_abs, tag = 'smem constant byte address 0x4 - core index']
  #allocation1 [shape = 'u32[144,128]{1,0:T(1,128)}', space=vmem, size = 0x12000, scoped, tag = 'internal scratch']
  %s0 = inlined_call_operand.vmem [shape: bf16[2,16,128], index: 0, kind: input, shape index: {}]
  %s1 = inlined_call_operand.vmem [shape: bf16[16,16], index: 1, kind: input, shape index: {}]
  %s2 = inlined_call_operand.vmem [shape: f32[16,1], index: 2, kind: input, shape index: {}]
  %s3 = inlined_call_operand.vmem [shape: f32[16,1], index: 3, kind: input, shape index: {}]
  %s4 = inlined_call_operand.hbm [shape: f32[2,16,128], index: 4, kind: output, shape index: {}]
  %s5 = sld [smem:[#allocation0]]
  $region49: #{tpu_custom_call.1} parent=0
    _
  %s7 = ssub.s32 1, %s5
  %s8 = scalar_select 0, %s7, %s5
  $region1: #{tpu_custom_call.1} parent=0
    #allocation2 [shape = 'u8[16384]{0}', space=vmem, size = 0x4000, scoped, tag = 'output window, operand 0']
    #allocation3 [shape = 's32[2]{0}', space=sflag, size = 0x8, scoped, tag = 'scoped memory for tpu_custom_call.1']
    %9 = vsyncpa [#allocation3], 0
    %s10 = scalar_lea.sflag [#allocation3], 1
    %11 = vsyncpa %s10, 0
    loop: start=0, step=1, limit=4
    $region2: #{tpu_custom_call.1} parent=1 // loop_pre_header
      _
    $region3: #{tpu_custom_call.1} parent=1 // loop_header
      %s13 = sphi 0, %s17
      %p14 = scmp.ge.s32.totalorder %s13, 4
      %s23 = sphi 0, %s25
      %s26 = sphi 0, %s23
      %s27 = sphi 0, %s26
      %s43 = sphi 0, %s27
      %s47 = sphi 0, %s47
      %s49 = sphi 0, %s47
      %s50 = sphi 0, %s49
      %s64 = sphi 0, %s50
      %s68 = sphi 0, %s68
      %s70 = sphi 0, %s68
      %s71 = sphi 0, %s70
      %s85 = sphi 0, %s71
      %s89 = sphi 0, %s89
      %s91 = sphi 0, %s89
      %s92 = sphi 0, %s91
      %s106 = sphi 0, %s92
      %s112 = sphi 0, %s114
      %s115 = sphi 0, %s112
      %s116 = sphi 0, %s115
      %s132 = sphi 0, %s116
    $region4: #{tpu_custom_call.1} parent=1 // loop_header_branch
      %16 = sbr.rel (%p14) target = $region8
    $region5: #{tpu_custom_call.1} parent=1 // loop_body
      %s18 = ssub.s32 %s13, 1
      %s19 = ssub.s32 %s13, 2
      %s20 = sadd.s32 %s13, 1
      %s21 = ssub.s32 %s13, %s20
      %p22 = scmp.eq.s32.totalorder %s21, 0
      %s24 = sadd.s32 %s23, 1
      %s25 = scalar_select %p22, %s23, %s24
      %p28 = pneg %p22
      %p29 = scmp.eq.s32.totalorder %s13, 1
      %p30 = por %p28, %p29
      %p31 = scmp.ne.s32.totalorder %s23, %s26
      %p32 = scmp.eq.s32.totalorder %s13, 0
      %p33 = por %p31, %p32
      %p34 = scmp.ne.s32.totalorder %s23, %s26
      %p35 = scmp.eq.s32.totalorder %s18, 1
      %p36 = por %p34, %p35
      %p37 = scmp.ne.s32.totalorder %s26, %s27
      %p38 = scmp.eq.s32.totalorder %s18, 0
      %p39 = por %p37, %p38
      %p40 = scmp.ne.s32.totalorder %s26, %s27
      %p41 = scmp.eq.s32.totalorder %s19, 1
      %p42 = por %p40, %p41
      %p44 = scmp.ne.s32.totalorder %s27, %s43
      %p45 = scmp.eq.s32.totalorder %s19, 0
      %p46 = por %p44, %p45
      %s48 = sadd.s32 %s47, 1
      %p51 = scmp.eq.s32.totalorder %s13, 1
      %p52 = scmp.ne.s32.totalorder %s47, %s49
      %p53 = scmp.eq.s32.totalorder %s13, 0
      %p54 = por %p52, %p53
      %p55 = scmp.ne.s32.totalorder %s47, %s49
      %p56 = scmp.eq.s32.totalorder %s18, 1
      %p57 = por %p55, %p56
      %p58 = scmp.ne.s32.totalorder %s49, %s50
      %p59 = scmp.eq.s32.totalorder %s18, 0
      %p60 = por %p58, %p59
      %p61 = scmp.ne.s32.totalorder %s49, %s50
      %p62 = scmp.eq.s32.totalorder %s19, 1
      %p63 = por %p61, %p62
      %p65 = scmp.ne.s32.totalorder %s50, %s64
      %p66 = scmp.eq.s32.totalorder %s19, 0
      %p67 = por %p65, %p66
      %s69 = sadd.s32 %s68, 1
      %p72 = scmp.eq.s32.totalorder %s13, 1
      %p73 = scmp.ne.s32.totalorder %s68, %s70
      %p74 = scmp.eq.s32.totalorder %s13, 0
      %p75 = por %p73, %p74
      %p76 = scmp.ne.s32.totalorder %s68, %s70
      %p77 = scmp.eq.s32.totalorder %s18, 1
      %p78 = por %p76, %p77
      %p79 = scmp.ne.s32.totalorder %s70, %s71
      %p80 = scmp.eq.s32.totalorder %s18, 0
      %p81 = por %p79, %p80
      %p82 = scmp.ne.s32.totalorder %s70, %s71
      %p83 = scmp.eq.s32.totalorder %s19, 1
      %p84 = por %p82, %p83
      %p86 = scmp.ne.s32.totalorder %s71, %s85
      %p87 = scmp.eq.s32.totalorder %s19, 0
      %p88 = por %p86, %p87
      %s90 = sadd.s32 %s89, 1
      %p93 = scmp.eq.s32.totalorder %s13, 1
      %p94 = scmp.ne.s32.totalorder %s89, %s91
      %p95 = scmp.eq.s32.totalorder %s13, 0
      %p96 = por %p94, %p95
      %p97 = scmp.ne.s32.totalorder %s89, %s91
      %p98 = scmp.eq.s32.totalorder %s18, 1
      %p99 = por %p97, %p98
      %p100 = scmp.ne.s32.totalorder %s91, %s92
      %p101 = scmp.eq.s32.totalorder %s18, 0
      %p102 = por %p100, %p101
      %p103 = scmp.ne.s32.totalorder %s91, %s92
      %p104 = scmp.eq.s32.totalorder %s19, 1
      %p105 = por %p103, %p104
      %p107 = scmp.ne.s32.totalorder %s92, %s106
      %p108 = scmp.eq.s32.totalorder %s19, 0
      %p109 = por %p107, %p108
      %s110 = ssub.s32 %s13, %s20
      %p111 = scmp.eq.s32.totalorder %s110, 0
      %s113 = sadd.s32 %s112, 1
      %s114 = scalar_select %p111, %s112, %s113
      %p117 = pneg %p111
      %p118 = scmp.eq.s32.totalorder %s13, 1
      %p119 = por %p117, %p118
      %p120 = scmp.ne.s32.totalorder %s112, %s115
      %p121 = scmp.eq.s32.totalorder %s13, 0
      %p122 = por %p120, %p121
      %p123 = scmp.ne.s32.totalorder %s112, %s115
      %p124 = scmp.eq.s32.totalorder %s18, 1
      %p125 = por %p123, %p124
      %p126 = scmp.ne.s32.totalorder %s115, %s116
      %p127 = scmp.eq.s32.totalorder %s18, 0
      %p128 = por %p126, %p127
      %p129 = scmp.ne.s32.totalorder %s115, %s116
      %p130 = scmp.eq.s32.totalorder %s19, 1
      %p131 = por %p129, %p130
      %p133 = scmp.ne.s32.totalorder %s116, %s132
      %p134 = scmp.eq.s32.totalorder %s19, 0
      %p135 = por %p133, %p134
      %p136 = scmp.le.s32.totalorder 1, %s13
      %p137 = scmp.lt.s32.totalorder %s13, 3
      %p138 = pnand %p136, %p137
      %p139 = pneg %p138
      // Predicated region
      $region9: #{tpu_custom_call.1} parent=5 // pred_check
        _
      $region10: #{tpu_custom_call.1} parent=5 // pred_check_branch
        %141 = sbr.rel (%p138) target = $region12
      $region11: #{tpu_custom_call.1} parent=5 // pred_region
        %s142 = ssub.s32 %s13, 1
        // Predicated region
        $region13: #{tpu_custom_call.1} parent=11 // pred_check
          %p143 = pneg %p60
        $region14: #{tpu_custom_call.1} parent=11 // pred_check_branch
          %145 = sbr.rel (%p143) target = $region16
        $region15: #{tpu_custom_call.1} parent=11 // pred_region
          _
        $region16: #{tpu_custom_call.1} parent=11 // pred_fallthru
          _
        // Predicated region
        $region17: #{tpu_custom_call.1} parent=11 // pred_check
          %p146 = pneg %p81
        $region18: #{tpu_custom_call.1} parent=11 // pred_check_branch
          %148 = sbr.rel (%p146) target = $region20
        $region19: #{tpu_custom_call.1} parent=11 // pred_region
          _
        $region20: #{tpu_custom_call.1} parent=11 // pred_fallthru
          _
        // Predicated region
        $region21: #{tpu_custom_call.1} parent=11 // pred_check
          %p149 = pneg %p102
        $region22: #{tpu_custom_call.1} parent=11 // pred_check_branch
          %151 = sbr.rel (%p149) target = $region24
        $region23: #{tpu_custom_call.1} parent=11 // pred_region
          _
        $region24: #{tpu_custom_call.1} parent=11 // pred_fallthru
          _
      $region12: #{tpu_custom_call.1} parent=5 // pred_fallthru
        _
      %p152 = scmp.lt.s32.totalorder %s13, 2
      // Predicated region
      $region25: #{tpu_custom_call.1} parent=5 // pred_check
        %p153 = pneg %p152
      $region26: #{tpu_custom_call.1} parent=5 // pred_check_branch
        %155 = sbr.rel (%p153) target = $region28
      $region27: #{tpu_custom_call.1} parent=5 // pred_region
        // Predicated region
        $region29: #{tpu_custom_call.1} parent=27 // pred_check
          %p156 = pneg %p33
        $region30: #{tpu_custom_call.1} parent=27 // pred_check_branch
          %158 = sbr.rel (%p156) target = $region32
        $region31: #{tpu_custom_call.1} parent=27 // pred_region
          %p159 = scmp.lt.s32.totalorder %s13, 1
          %s160 = scalar_select %p159, %s13, 1
          %s161 = smul.addr %s160, 2
          %s162 = smul.addr %s161, 4
          %s163 = scalar_lea.vmem %s0, %s162
        $region32: #{tpu_custom_call.1} parent=27 // pred_fallthru
          _
      $region28: #{tpu_custom_call.1} parent=5 // pred_fallthru
        _
      %p164 = scmp.le.s32.totalorder 1, %s13
      %p165 = scmp.lt.s32.totalorder %s13, 3
      %p166 = pnand %p164, %p165
      %p167 = pneg %p166
      // Predicated region
      $region33: #{tpu_custom_call.1} parent=5 // pred_check
        _
      $region34: #{tpu_custom_call.1} parent=5 // pred_check_branch
        %169 = sbr.rel (%p166) target = $region36
      $region35: #{tpu_custom_call.1} parent=5 // pred_region
        %s170 = ssub.s32 %s13, 1
        %p171 = scmp.lt.s32.totalorder %s18, 1
        %s172 = scalar_select %p171, %s18, 1
        %s173 = smul.addr %s172, 2
        %s174 = smul.addr %s173, 4
        %s175 = scalar_lea.vmem %s0, %s174
        %p176 = pneg %p39
        %p177 = pneg %p36
        %p178 = pneg %p60
        %p179 = pneg %p57
        %p180 = pneg %p81
        %p181 = pneg %p78
        %p182 = pneg %p102
        %p183 = pneg %p99
        %p184 = pneg %p128
        %p185 = pneg %p125
        %s186 = sand.u32 %s115, 1
        %s187 = scalar_lea.sflag [#allocation3], %s186
        %s188 = sand.u32 %s115, 1
        %s189 = smul.addr %s188, 16
        %s190 = scalar_lea.vmem [#allocation2], %s189
        %p191 = scmp.lt.s32.totalorder %s18, 1
        %s192 = scalar_select %p191, %s18, 1
        %s193 = smul.addr %s192, 2
        %s194 = smul.addr %s193, 4
        %s195 = scalar_lea.vmem %s0, %s194
        %v197 = vld [vmem:[%s1] sm:$0xf]
        %v198 = vld [vmem:[%s1 + $0x4] sm:$0xf]
        %v199 = vld [vmem:[%s195] sm:$0xf]
        %v200 = vld [vmem:[%s195 + $0x4] sm:$0xf]
        %v203 = vunpack.c.l.b16 %v197
        %v204 = vunpack.c.l.b16 %v198
        %v205 = vpack.c.b16 %v204, %v203
        %v208 = vunpack.c.l.b16 %v199
        %v209 = vunpack.c.l.b16 %v200
        %v210 = vpack.c.b16 %v209, %v208
        %vm212 = vcmask 130048
        %v214 = vsel %vm212, %v205, 0
        %216 = vmatprep.subr.bf16.mxu0 0
        %217 = vmatpush1.bf16.msra.mxu0 %v210
        %218 = vmatprep.subr.bf16.mxu0 0
        %219 = vmatpush1.bf16.msra.mxu0 0
        %220 = vmatprep.subr.bf16.mxu0 0
        %221 = vmatpush1.bf16.msra.mxu0 0
        %222 = vmatprep.subr.bf16.mxu0 0
        %223 = vmatpush1.bf16.msra.mxu0 0
        %224 = vmatprep.subr.bf16.mxu0 0
        %225 = vmatpush1.bf16.msra.mxu0 0
        %226 = vmatprep.subr.bf16.mxu0 0
        %227 = vmatpush1.bf16.msra.mxu0 0
        %228 = vmatprep.subr.bf16.mxu0 0
        %229 = vmatpush1.bf16.msra.mxu0 0
        %230 = vmatprep.subr.bf16.mxu0 0
        %231 = vmatpush1.bf16.msra.mxu0 0
        %232 = vmatprep.subr.bf16.mxu0 0
        %233 = vmatpush1.bf16.msra.mxu0 0
        %234 = vmatprep.subr.bf16.mxu0 0
        %235 = vmatpush1.bf16.msra.mxu0 0
        %236 = vmatprep.subr.bf16.mxu0 0
        %237 = vmatpush1.bf16.msra.mxu0 0
        %238 = vmatprep.subr.bf16.mxu0 0
        %239 = vmatpush1.bf16.msra.mxu0 0
        %240 = vmatprep.subr.bf16.mxu0 0
        %241 = vmatpush1.bf16.msra.mxu0 0
        %242 = vmatprep.subr.bf16.mxu0 0
        %243 = vmatpush1.bf16.msra.mxu0 0
        %244 = vmatprep.subr.bf16.mxu0 0
        %245 = vmatpush1.bf16.msra.mxu0 0
        %246 = vmatprep.subr.bf16.mxu0 0
        %247 = vmatpush1.bf16.msra.mxu0 0
        %248 = vmatprep.mubr.bf16.mxu0 0
        %249 = vmatmul.mubr.bf16.gmra.mrb[0].mxu0 %v214
        %v250 = vpop.f32.mrb[0].mxu0
        %v251 = vadd.f32 0.0, %v250
        %v252 = vpop.f32.mrb[0].mxu0
        %v253 = vpop.f32.mrb[0].mxu0
        %v254 = vadd.f32 0.0, %v253
        %v255 = vpop.f32.mrb[0].mxu0
        %256 = vdwg.mxu0
        %257 = vadd.xlane.f32.xlu0 %v251
        %v258 = vpop.xlane.xlu0 %257
        %259 = vadd.xlane.f32.xlu0 %v254
        %v260 = vpop.xlane.xlu0 %259
        %v261 = vmul.f32 %v251, %v251
        %v262 = vmul.f32 %v254, %v254
        %263 = vadd.xlane.f32.xlu0 %v261
        %v264 = vpop.xlane.xlu0 %263
        %265 = vadd.xlane.f32.xlu0 %v262
        %v266 = vpop.xlane.xlu0 %265
        %v267 = vld [vmem:[%s2] sm:$0xff]
        %v268 = vld [vmem:[%s2 + $0x8] sm:$0xff]
        %v269 = vld [vmem:[%s3] sm:$0xff]
        %v270 = vld [vmem:[%s3 + $0x8] sm:$0xff]
        %v271 = vadd.f32 %v258, %v260
        %v272 = vrot.slane %v271, 4
        %v273 = vadd.f32 %v271, %v272
        %v274 = vrot.slane %v273, 2
        %v275 = vadd.f32 %v273, %v274
        %v276 = vrot.slane %v275, 1
        %v277 = vadd.f32 %v275, %v276
        %v278 = vadd.f32 %v264, %v266
        %v279 = vrot.slane %v278, 4
        %v280 = vadd.f32 %v278, %v279
        %v281 = vrot.slane %v280, 2
        %v282 = vadd.f32 %v280, %v281
        %v283 = vrot.slane %v282, 1
        %v284 = vadd.f32 %v282, %v283
        %v285 = vmul.f32 %v277, 0.0009765625
        %v286 = vmul.f32 %v284, 0.0009765625
        %v287 = vmul.f32 %v285, %v285
        %v288 = vsub.f32 %v286, %v287
        %v289 = vmax.f32 %v288, 0.0
        %v290 = vadd.f32 %v289, 1e-05
        %v291 = vrsqrt.pop %v290
        %v292 = vsub.f32 %v251, %v285
        %v293 = vsub.f32 %v254, %v285
        %v294 = vmul.f32 %v291, %v267
        %v295 = vmul.f32 %v291, %v268
        %297 = vset.pattern.permute.xlu0 0
        %298 = vperm.xlu0 %297, %v294
        %v299 = vpop.permute.xlu0 %298
        %302 = vset.pattern.permute.xlu0 0
        %303 = vperm.xlu0 %302, %v295
        %v304 = vpop.permute.xlu0 %303
        %v306 = vmul.f32 %v292, %v299
        %v307 = vmul.f32 %v293, %v304
        %309 = vset.pattern.permute.xlu0 0
        %310 = vperm.xlu0 %309, %v269
        %v311 = vpop.permute.xlu0 %310
        %314 = vset.pattern.permute.xlu0 0
        %315 = vperm.xlu0 %314, %v270
        %v316 = vpop.permute.xlu0 %315
        %v318 = vadd.f32 %v306, %v311
        %v319 = vadd.f32 %v307, %v316
        %v320 = vxor.u32 %v318, 2147483648
        %v321 = vxor.u32 %v319, 2147483648
        %v322 = vmul.f32 %v320, 1.442695
        %v323 = vpow.pop %v322
        %v324 = vmul.f32 %v321, 1.442695
        %v325 = vpow.pop %v324
        %v326 = vadd.f32 %v323, 1.0
        %v327 = vadd.f32 %v325, 1.0
        %v328 = vrcp.pop %v326
        %v329 = vmul.f32 1.0, %v328
        %v330 = vrcp.pop %v327
        %v331 = vmul.f32 1.0, %v330
        %v332 = vmul.f32 %v318, %v329
        %v333 = vmul.f32 %v319, %v331
        %334 = vst [vmem:[%s190] sm:$0xff] %v332
        %335 = vst [vmem:[%s190 + $0x8] sm:$0xff] %v333
        %s336 = sand.u32 %s115, 1
        %s337 = scalar_lea.sflag [#allocation3], %s336
        %s338 = sand.u32 %s115, 1
        %s339 = smul.addr %s338, 16
        %s340 = scalar_lea.vmem [#allocation2], %s339
        // Predicated region
        $region37: #{tpu_custom_call.1} parent=35 // pred_check
          %p341 = pneg %p125
        $region38: #{tpu_custom_call.1} parent=35 // pred_check_branch
          %343 = sbr.rel (%p341) target = $region40
        $region39: #{tpu_custom_call.1} parent=35 // pred_region
          %s345 = ssub.s32 256, 256
          %346 = vsyncadd %s337, %s345
          %s347 = smul.addr %s18, 2
          %s348 = smul.addr %s347, 128
          %s349 = scalar_lea.hbm %s4, %s348
          %s350 = sshll.u32 %s340, 4
          %s351 = int_to_ptr.vmem [resolvable:$true] %s350
          %356 = dma.vmem_to_hbm [thread:$0]  %s351, 256, %s349, %s337, 128, 128, 8
        $region40: #{tpu_custom_call.1} parent=35 // pred_fallthru
          _
      $region36: #{tpu_custom_call.1} parent=5 // pred_fallthru
        _
      %p357 = scmp.le.s32.totalorder 2, %s13
      // Predicated region
      $region41: #{tpu_custom_call.1} parent=5 // pred_check
        %p358 = pneg %p357
      $region42: #{tpu_custom_call.1} parent=5 // pred_check_branch
        %360 = sbr.rel (%p358) target = $region44
      $region43: #{tpu_custom_call.1} parent=5 // pred_region
        %s361 = ssub.s32 %s13, 2
        // Predicated region
        $region45: #{tpu_custom_call.1} parent=43 // pred_check
          %p362 = pneg %p131
        $region46: #{tpu_custom_call.1} parent=43 // pred_check_branch
          %364 = sbr.rel (%p362) target = $region48
        $region47: #{tpu_custom_call.1} parent=43 // pred_region
          %s365 = sand.u32 %s116, 1
          %s366 = scalar_lea.sflag [#allocation3], %s365
          %s367 = sand.u32 %s116, 1
          %s368 = smul.addr %s367, 16
          %s369 = scalar_lea.vmem [#allocation2], %s368
          %370 = dma.done %s366, 256
        $region48: #{tpu_custom_call.1} parent=43 // pred_fallthru
          _
      $region44: #{tpu_custom_call.1} parent=5 // pred_fallthru
        _
    $region6: #{tpu_custom_call.1} parent=1 // loop_footer
      %s17 = sadd.s32 1, %s13
    $region7: #{tpu_custom_call.1} parent=1 // loop_footer_branch
      %12 = sbr.rel target = $region3
    $region8: #{tpu_custom_call.1} parent=1 // loop_exit
      _
    %371 = vsyncpa [#allocation3], 1
    %s372 = scalar_lea.sflag [#allocation3], 1
    %373 = vsyncpa %s372, 1

</llo_original>
